<compile_context>
chip_gen: v7x
topology: tpu7x:2x2x1
jax: 0.10.0
libtpu: 0.0.40
codegen_flags: <defaults>
</compile_context>

<pallas_src>
import functools

import jax
import jax.numpy as jnp
from jax.experimental import pallas as pl
from jax.experimental.pallas import tpu as pltpu

LANE = 128
SUBLANE = 8
_MAX_SINGLE_TILE = 4096   # v5e/v6e: fewest grid steps wins (~0.35us/step overhead)


def _round_up(n, m):
    return ((n + m - 1) // m) * m


def _two_tensorcores():
    # v7x has 2 TensorCores per chip; v5e/v6e have 1.
    try:
        kind = jax.devices()[0].device_kind.lower()
    except Exception:
        return False
    return "v7" in kind


def _qnet_kernel(x_ref, w1_ref, b1_ref, w2_ref, b2_ref, out_ref):
    # hidden = relu(x @ W1 + b1): bf16 MXU operands, f32 accumulation.
    x = x_ref[...].astype(w1_ref.dtype)
    h = jnp.dot(x, w1_ref[...], preferred_element_type=jnp.float32)
    h = jnp.maximum(h + b1_ref[...], 0.0)          # b1 is [1, hid_p] -> broadcasts
    # out = hidden @ W2 + b2
    o = jnp.dot(h.astype(w2_ref.dtype), w2_ref[...],
                preferred_element_type=jnp.float32)
    out_ref[...] = (o + b2_ref[...]).astype(out_ref.dtype)


def prepare_params(w1, b1, w2, b2, param_dtype=jnp.bfloat16):
    """Zero-pad hidden/output dims to lane-dense (128-multiple) widths and
    store weights in bf16.  Done once at init; returns padded params plus the
    true output size.
    w1: [in, hid], b1: [hid], w2: [hid, out], b2: [out]
    """
    in_size, hid = w1.shape
    out_size = w2.shape[1]
    hid_p = _round_up(hid, LANE)
    out_p = _round_up(out_size, LANE)
    w1p = jnp.zeros((in_size, hid_p), param_dtype).at[:, :hid].set(
        w1.astype(param_dtype))
    b1p = jnp.zeros((1, hid_p), jnp.float32).at[0, :hid].set(
        b1.astype(jnp.float32))
    w2p = jnp.zeros((hid_p, out_p), param_dtype).at[:hid, :out_size].set(
        w2.astype(param_dtype))
    b2p = jnp.zeros((1, out_p), jnp.float32).at[0, :out_size].set(
        b2.astype(jnp.float32))
    return w1p, b1p, w2p, b2p, out_size


@functools.partial(jax.jit, static_argnames=("out_size", "max_single_tile"))
def linear_qnet_forward(x, w1p, b1p, w2p, b2p, out_size,
                        max_single_tile=_MAX_SINGLE_TILE):
    """x: [B, in].  Padded params from prepare_params.  Returns [B, out_size]."""
    B, in_size = x.shape
    hid_p = w1p.shape[1]
    out_p = w2p.shape[1]

    # Batch-tile selection (gen-gated):
    #   v7x, B > 256: split into >= 2 tiles so both TensorCores get work.
    #   v5e/v6e:      single tile up to max_single_tile (per-step overhead
    #                 dominates; VMEM footprint per tile is ~MB, not a limit).
    if _two_tensorcores() and B > 256:
        tb = min(512, _round_up(pl.cdiv(B, 2), SUBLANE))
    elif B <= max_single_tile:
        tb = B                      # single block: full-extent dims are legal
    else:
        tb = max_single_tile        # multiple of 8; last block may be ragged
    grid = (pl.cdiv(B, tb),)

    flops = 2 * B * (in_size * hid_p + hid_p * out_p)
    bytes_accessed = (x.size * x.dtype.itemsize
                      + w1p.size * w1p.dtype.itemsize
                      + w2p.size * w2p.dtype.itemsize
                      + b1p.size * b1p.dtype.itemsize
                      + b2p.size * b2p.dtype.itemsize
                      + B * out_p * x.dtype.itemsize)

    out = pl.pallas_call(
        _qnet_kernel,
        out_shape=jax.ShapeDtypeStruct((B, out_p), x.dtype),
        grid=grid,
        in_specs=[
            # x: tiled over the batch axis (last block may be ragged; OOB rows
            # are never observed — see header comment).
            pl.BlockSpec((tb, in_size), lambda i: (i, 0)),
            # Weights/biases: constant block index -> stay VMEM-resident
            # across grid steps (no re-DMA per batch tile).
            pl.BlockSpec((in_size, hid_p), lambda i: (0, 0)),
            pl.BlockSpec((1, hid_p), lambda i: (0, 0)),
            pl.BlockSpec((hid_p, out_p), lambda i: (0, 0)),
            pl.BlockSpec((1, out_p), lambda i: (0, 0)),
        ],
        out_specs=pl.BlockSpec((tb, out_p), lambda i: (i, 0)),
        compiler_params=pltpu.CompilerParams(
            dimension_semantics=("parallel",)),
        cost_estimate=pl.CostEstimate(
            flops=flops, transcendentals=0, bytes_accessed=bytes_accessed),
    )(x, w1p, b1p, w2p, b2p)

    # Slice off the zero-padded output lanes.  Because this wrapper is jitted
    # (and composes with any enclosing jit), XLA fuses the slice with the
    # custom-call consumer instead of doing a second pass over the padded slab.
    return out[:, :out_size]


def init_params(key, input_size, hidden_size, output_size, dtype=jnp.float32):
    """Deterministic PyTorch-style (uniform +/- 1/sqrt(fan_in)) init."""
    k1, k2, k3, k4 = jax.random.split(key, 4)
    lim1 = 1.0 / (input_size ** 0.5)
    lim2 = 1.0 / (hidden_size ** 0.5)
    # Stored already transposed relative to nn.Linear.weight ([out, in]).
    w1 = jax.random.uniform(k1, (input_size, hidden_size), dtype, -lim1, lim1)
    b1 = jax.random.uniform(k2, (hidden_size,), dtype, -lim1, lim1)
    w2 = jax.random.uniform(k3, (hidden_size, output_size), dtype, -lim2, lim2)
    b2 = jax.random.uniform(k4, (output_size,), dtype, -lim2, lim2)
    return w1, b1, w2, b2


if __name__ == "__main__":
    # Snake-game sizes: 11 state features -> 32 hidden -> 3 actions.
    INPUT, HIDDEN, OUTPUT = 11, 32, 3

    key = jax.random.PRNGKey(0)
    kx, kx2, kp = jax.random.split(key, 3)
    w1, b1, w2, b2 = init_params(kp, INPUT, HIDDEN, OUTPUT)
    w1p, b1p, w2p, b2p, out_size = prepare_params(w1, b1, w2, b2)

    # Reference with the same bf16-operand / f32-accumulate precision.
    w1_bf = w1.astype(jnp.bfloat16)
    w2_bf = w2.astype(jnp.bfloat16)

    def ref_fwd(x):
        h = jnp.dot(x.astype(jnp.bfloat16), w1_bf,
                    preferred_element_type=jnp.float32) + b1
        h = jnp.maximum(h, 0.0)
        return jnp.dot(h.astype(jnp.bfloat16), w2_bf,
                       preferred_element_type=jnp.float32) + b2

    # 1) Tiny inference-style batch (single grid point).
    B = 8
    x = jax.random.normal(kx, (B, INPUT), jnp.float32)
    out = jax.block_until_ready(
        linear_qnet_forward(x, w1p, b1p, w2p, b2p, out_size))
    assert out.shape == (B, OUTPUT)
    assert jnp.allclose(out, ref_fwd(x), atol=1e-3, rtol=1e-3)

    # 2) Replay-buffer-style batch: single tile on v5e/v6e, >=2 (ragged) tiles
    #    on v7x.  No wrapper-side batch padding in either case.
    B2 = 3000
    x2 = jax.random.normal(kx2, (B2, INPUT), jnp.float32)
    out2 = jax.block_until_ready(
        linear_qnet_forward(x2, w1p, b1p, w2p, b2p, out_size))
    assert out2.shape == (B2, OUTPUT)
    assert jnp.allclose(out2, ref_fwd(x2), atol=1e-3, rtol=1e-3)

    # 3) Force the multi-tile ragged-last-block path on any chip generation.
    out3 = jax.block_until_ready(
        linear_qnet_forward(x2, w1p, b1p, w2p, b2p, out_size,
                            max_single_tile=512))
    assert out3.shape == (B2, OUTPUT)
    assert jnp.allclose(out3, ref_fwd(x2), atol=1e-3, rtol=1e-3)

    print("KERNEL_OK")
</pallas_src>

<mosaic_0001>
module attributes {stable_mosaic.version = 11 : i64} {
  func.func @_qnet_kernel(%arg0: i32, %arg1: memref<8x11xf32, #tpu.memory_space<vmem>>, %arg2: memref<11x128xbf16, #tpu.memory_space<vmem>>, %arg3: memref<1x128xf32, #tpu.memory_space<vmem>>, %arg4: memref<128x128xbf16, #tpu.memory_space<vmem>>, %arg5: memref<1x128xf32, #tpu.memory_space<vmem>>, %arg6: memref<8x128xf32, #tpu.memory_space<vmem>>) attributes {dimension_semantics = [#tpu.dimension_semantics<parallel>], iteration_bounds = array<i64: 1>, scalar_prefetch = 0 : i64, scratch_operands = 0 : i64, tpu.core_type = #tpu.core_type<tc>, window_params = [{transform_indices = @transform_0, window_bounds = array<i64: 8, 11>}, {pipeline_mode = #tpu.pipeline_mode<synchronous>, transform_indices = @transform_1, window_bounds = array<i64: 11, 128>}, {pipeline_mode = #tpu.pipeline_mode<synchronous>, transform_indices = @transform_2, window_bounds = array<i64: 1, 128>}, {pipeline_mode = #tpu.pipeline_mode<synchronous>, transform_indices = @transform_3, window_bounds = array<i64: 128, 128>}, {pipeline_mode = #tpu.pipeline_mode<synchronous>, transform_indices = @transform_4, window_bounds = array<i64: 1, 128>}, {transform_indices = @transform_5, window_bounds = array<i64: 8, 128>}]} {
    %c0 = arith.constant 0 : index
    %c0_0 = arith.constant 0 : index
    %0 = vector.load %arg1[%c0, %c0_0] : memref<8x11xf32, #tpu.memory_space<vmem>>, vector<8x11xf32>
    %1 = arith.truncf %0 : vector<8x11xf32> to vector<8x11xbf16>
    %c0_1 = arith.constant 0 : index
    %c0_2 = arith.constant 0 : index
    %2 = vector.load %arg2[%c0_1, %c0_2] : memref<11x128xbf16, #tpu.memory_space<vmem>>, vector<11x128xbf16>
    %cst = arith.constant dense<0.000000e+00> : vector<8x128xf32>
    %3 = tpu.matmul %1, %2, %cst {dimension_numbers = #tpu.dot_dimension_numbers<[1], [0], [0], [1], [0, 0, 1, 1], [], []>} : vector<8x11xbf16>, vector<11x128xbf16>, vector<8x128xf32> -> vector<8x128xf32>
    %c0_3 = arith.constant 0 : index
    %c0_4 = arith.constant 0 : index
    %4 = vector.load %arg3[%c0_3, %c0_4] : memref<1x128xf32, #tpu.memory_space<vmem>>, vector<1x128xf32>
    %5 = vector.broadcast %4 : vector<1x128xf32> to vector<8x128xf32>
    %6 = arith.addf %3, %5 : vector<8x128xf32>
    %cst_5 = arith.constant 0.000000e+00 : f32
    %7 = vector.broadcast %cst_5 : f32 to vector<8x128xf32>
    %8 = arith.maximumf %6, %7 : vector<8x128xf32>
    %9 = arith.truncf %8 : vector<8x128xf32> to vector<8x128xbf16>
    %c0_6 = arith.constant 0 : index
    %c0_7 = arith.constant 0 : index
    %10 = vector.load %arg4[%c0_6, %c0_7] : memref<128x128xbf16, #tpu.memory_space<vmem>>, vector<128x128xbf16>
    %cst_8 = arith.constant dense<0.000000e+00> : vector<8x128xf32>
    %11 = tpu.matmul %9, %10, %cst_8 {dimension_numbers = #tpu.dot_dimension_numbers<[1], [0], [0], [1], [0, 0, 1, 1], [], []>} : vector<8x128xbf16>, vector<128x128xbf16>, vector<8x128xf32> -> vector<8x128xf32>
    %c0_9 = arith.constant 0 : index
    %c0_10 = arith.constant 0 : index
    %12 = vector.load %arg5[%c0_9, %c0_10] : memref<1x128xf32, #tpu.memory_space<vmem>>, vector<1x128xf32>
    %13 = vector.broadcast %12 : vector<1x128xf32> to vector<8x128xf32>
    %14 = arith.addf %11, %13 : vector<8x128xf32>
    %c0_11 = arith.constant 0 : index
    %c0_12 = arith.constant 0 : index
    %15 = vector.load %arg6[%c0_11, %c0_12] : memref<8x128xf32, #tpu.memory_space<vmem>>, vector<8x128xf32>
    tpu.vector_store %arg6[%c0_11, %c0_12], %14 {strides = array<i32>} : memref<8x128xf32, #tpu.memory_space<vmem>>, vector<8x128xf32>,
    return
  }
  func.func @transform_0(%arg0: i32) -> (i32, i32) {
    %c0_i32 = arith.constant 0 : i32
    %c0_i32_0 = arith.constant 0 : i32
    return %arg0, %c0_i32 : i32, i32
  }
  func.func @transform_1(%arg0: i32) -> (i32, i32) {
    %c0_i32 = arith.constant 0 : i32
    %c0_i32_0 = arith.constant 0 : i32
    %c0_i32_1 = arith.constant 0 : i32
    return %c0_i32, %c0_i32_0 : i32, i32
  }
  func.func @transform_2(%arg0: i32) -> (i32, i32) {
    %c0_i32 = arith.constant 0 : i32
    %c0_i32_0 = arith.constant 0 : i32
    %c0_i32_1 = arith.constant 0 : i32
    return %c0_i32, %c0_i32_0 : i32, i32
  }
  func.func @transform_3(%arg0: i32) -> (i32, i32) {
    %c0_i32 = arith.constant 0 : i32
    %c0_i32_0 = arith.constant 0 : i32
    %c0_i32_1 = arith.constant 0 : i32
    return %c0_i32, %c0_i32_0 : i32, i32
  }
  func.func @transform_4(%arg0: i32) -> (i32, i32) {
    %c0_i32 = arith.constant 0 : i32
    %c0_i32_0 = arith.constant 0 : i32
    %c0_i32_1 = arith.constant 0 : i32
    return %c0_i32, %c0_i32_0 : i32, i32
  }
  func.func @transform_5(%arg0: i32) -> (i32, i32) {
    %c0_i32 = arith.constant 0 : i32
    %c0_i32_0 = arith.constant 0 : i32
    return %arg0, %c0_i32 : i32, i32
  }
}

</mosaic_0001>

<llo_original>
// kernel: linear_qnet_forward.1
$region0: #{linear_qnet_forward.1}
  #allocation0 [shape = 'u32[]', space=smem, size = 0x4, offset = 0x4, fixed_abs, tag = 'smem constant byte address 0x4 - core index']
  #allocation1 [shape = 'u32[144,128]{1,0:T(1,128)}', space=vmem, size = 0x12000, scoped, tag = 'internal scratch']
  %s0 = inlined_call_operand.hbm [shape: f32[8,11], index: 0, kind: input, shape index: {}]
  %s1 = inlined_call_operand.hbm [shape: bf16[11,128], index: 1, kind: input, shape index: {}]
  %s2 = inlined_call_operand.vmem [shape: f32[1,128], index: 2, kind: input, shape index: {}]
  %s3 = inlined_call_operand.hbm [shape: bf16[128,128], index: 3, kind: input, shape index: {}]
  %s4 = inlined_call_operand.vmem [shape: f32[1,128], index: 4, kind: input, shape index: {}]
  %s5 = inlined_call_operand.vmem [shape: f32[8,128], index: 5, kind: output, shape index: {}]
  %s6 = sld [smem:[#allocation0]]
  $region42: #{linear_qnet_forward.1} parent=0
    _
  %s8 = ssub.s32 1, %s6
  %s9 = scalar_select 0, %s8, %s6
  $region1: #{linear_qnet_forward.1} parent=0
    #allocation2 [shape = 'u8[4096]{0}', space=vmem, size = 0x1000, scoped, tag = 'input window, operand 0, single buffered']
    #allocation3 [shape = 's32[1]{0}', space=sflag, size = 0x4, scoped, tag = 'scoped memory for linear_qnet_forward.1']
    #allocation4 [shape = 'u8[4096]{0}', space=vmem, size = 0x1000, scoped, tag = 'input window, operand 1, single buffered']
    #allocation5 [shape = 's32[1]{0}', space=sflag, size = 0x4, scoped, tag = 'scoped memory for linear_qnet_forward.1']
    #allocation6 [shape = 'u8[32768]{0}', space=vmem, size = 0x8000, scoped, tag = 'input window, operand 3, single buffered']
    %10 = vsyncpa [#allocation3], 0
    %11 = vsyncpa [#allocation5], 0
    // Predicated region
    $region2: #{linear_qnet_forward.1} parent=1 // pred_check
      _
    $region3: #{linear_qnet_forward.1} parent=1 // pred_check_branch
      %13 = sbr.rel (0) target = $region5
    $region4: #{linear_qnet_forward.1} parent=1 // pred_region
      %s15 = ssub.s32 128, 128
      %16 = vsyncadd [#allocation3], %s15
      %s18 = sshll.u32 [#allocation2], 4
      %s19 = int_to_ptr.vmem [resolvable:$true] %s18
      %21 = dma.hbm_to_vmem [thread:$0]  %s0, 128, %s19, [#allocation3]
    $region5: #{linear_qnet_forward.1} parent=1 // pred_fallthru
      _
    // Predicated region
    $region6: #{linear_qnet_forward.1} parent=1 // pred_check
      _
    $region7: #{linear_qnet_forward.1} parent=1 // pred_check_branch
      %23 = sbr.rel (0) target = $region9
    $region8: #{linear_qnet_forward.1} parent=1 // pred_region
      %s25 = ssub.s32 128, 128
      %26 = vsyncadd [#allocation5], %s25
      %s27 = sshll.u32 [#allocation4], 4
      %s28 = int_to_ptr.vmem [resolvable:$true] %s27
      %33 = dma.hbm_to_vmem [thread:$0]  %s1, 128, %s28, [#allocation5], 64, 64, 4
    $region9: #{linear_qnet_forward.1} parent=1 // pred_fallthru
      _
    // Predicated region
    $region10: #{linear_qnet_forward.1} parent=1 // pred_check
      _
    $region11: #{linear_qnet_forward.1} parent=1 // pred_check_branch
      %35 = sbr.rel (0) target = $region13
    $region12: #{linear_qnet_forward.1} parent=1 // pred_region
      _
    $region13: #{linear_qnet_forward.1} parent=1 // pred_fallthru
      _
    // Predicated region
    $region14: #{linear_qnet_forward.1} parent=1 // pred_check
      _
    $region15: #{linear_qnet_forward.1} parent=1 // pred_check_branch
      %37 = sbr.rel (0) target = $region17
    $region16: #{linear_qnet_forward.1} parent=1 // pred_region
      %s39 = ssub.s32 1024, 1024
      %40 = vsyncadd [#allocation5], %s39
      %s41 = sshll.u32 [#allocation6], 4
      %s42 = int_to_ptr.vmem [resolvable:$true] %s41
      %47 = dma.hbm_to_vmem [thread:$0]  %s3, 1024, %s42, [#allocation5], 64, 64, 4
    $region17: #{linear_qnet_forward.1} parent=1 // pred_fallthru
      _
    // Predicated region
    $region18: #{linear_qnet_forward.1} parent=1 // pred_check
      _
    $region19: #{linear_qnet_forward.1} parent=1 // pred_check_branch
      %49 = sbr.rel (0) target = $region21
    $region20: #{linear_qnet_forward.1} parent=1 // pred_region
      _
    $region21: #{linear_qnet_forward.1} parent=1 // pred_fallthru
      _
    // Predicated region
    $region22: #{linear_qnet_forward.1} parent=1 // pred_check
      _
    $region23: #{linear_qnet_forward.1} parent=1 // pred_check_branch
      %51 = sbr.rel (0) target = $region25
    $region24: #{linear_qnet_forward.1} parent=1 // pred_region
      %52 = dma.done [#allocation3], 128
    $region25: #{linear_qnet_forward.1} parent=1 // pred_fallthru
      _
    // Predicated region
    $region26: #{linear_qnet_forward.1} parent=1 // pred_check
      _
    $region27: #{linear_qnet_forward.1} parent=1 // pred_check_branch
      %54 = sbr.rel (0) target = $region29
    $region28: #{linear_qnet_forward.1} parent=1 // pred_region
      %55 = dma.done [#allocation5], 128
    $region29: #{linear_qnet_forward.1} parent=1 // pred_fallthru
      _
    // Predicated region
    $region30: #{linear_qnet_forward.1} parent=1 // pred_check
      _
    $region31: #{linear_qnet_forward.1} parent=1 // pred_check_branch
      %57 = sbr.rel (0) target = $region33
    $region32: #{linear_qnet_forward.1} parent=1 // pred_region
      %58 = dma.done [#allocation5], 1024
    $region33: #{linear_qnet_forward.1} parent=1 // pred_fallthru
      _
    %v60 = vld [vmem:[#allocation2] sm:$0xff]
    %v61 = vpack.c.bf16 %v60, %v60
    %v62 = vld [vmem:[#allocation4] sm:$0xf]
    %v63 = vld [vmem:[#allocation4 + $0x4] sm:$0x3]
    %v64 = vld [vmem:[%s2] sm:$0x1]
    %v66 = vlaneseq
    %v67 = vshrl.u32 %v66, 7
    %v68 = vsub.s32 0, %v67
    %v69 = vrot.slane %v64, %v68
    %v73 = vunpack.c.l.b16 %v62
    %v74 = vunpack.c.l.b16 %v63
    %v75 = vpack.c.b16 %v74, %v73
    %vm76 = vcmask 89088
    %v78 = vsel %vm76, %v61, 0
    %vm80 = vcmask 1044480
    %vm81 = vcmask 1045504
    %v82 = vsel %vm80, 4294967295, 65535
    %v83 = vsel %vm81, %v82, 0
    %v85 = vand.u32 %v75, %v83
    %87 = vmatprep.subr.bf16.mxu0 0
    %88 = vmatpush1.bf16.msra.mxu0 %v85
    %89 = vmatprep.subr.bf16.mxu0 0
    %90 = vmatpush1.bf16.msra.mxu0 0
    %91 = vmatprep.subr.bf16.mxu0 0
    %92 = vmatpush1.bf16.msra.mxu0 0
    %93 = vmatprep.subr.bf16.mxu0 0
    %94 = vmatpush1.bf16.msra.mxu0 0
    %95 = vmatprep.subr.bf16.mxu0 0
    %96 = vmatpush1.bf16.msra.mxu0 0
    %97 = vmatprep.subr.bf16.mxu0 0
    %98 = vmatpush1.bf16.msra.mxu0 0
    %99 = vmatprep.subr.bf16.mxu0 0
    %100 = vmatpush1.bf16.msra.mxu0 0
    %101 = vmatprep.subr.bf16.mxu0 0
    %102 = vmatpush1.bf16.msra.mxu0 0
    %103 = vmatprep.subr.bf16.mxu0 0
    %104 = vmatpush1.bf16.msra.mxu0 0
    %105 = vmatprep.subr.bf16.mxu0 0
    %106 = vmatpush1.bf16.msra.mxu0 0
    %107 = vmatprep.subr.bf16.mxu0 0
    %108 = vmatpush1.bf16.msra.mxu0 0
    %109 = vmatprep.subr.bf16.mxu0 0
    %110 = vmatpush1.bf16.msra.mxu0 0
    %111 = vmatprep.subr.bf16.mxu0 0
    %112 = vmatpush1.bf16.msra.mxu0 0
    %113 = vmatprep.subr.bf16.mxu0 0
    %114 = vmatpush1.bf16.msra.mxu0 0
    %115 = vmatprep.subr.bf16.mxu0 0
    %116 = vmatpush1.bf16.msra.mxu0 0
    %117 = vmatprep.subr.bf16.mxu0 0
    %118 = vmatpush1.bf16.msra.mxu0 0
    %119 = vmatprep.mubr.bf16.mxu0 0
    %120 = vmatmul.mubr.bf16.gmra.mrb[0].mxu0 %v78
    %v121 = vpop.f32.mrb[0].mxu0
    %v122 = vadd.f32 %v69, %v121
    %v123 = vpop.f32.mrb[0].mxu0
    %v124 = vpop.f32.mrb[0].mxu0
    %v125 = vpop.f32.mrb[0].mxu0
    %126 = vdwg.mxu0
    %v127 = vmax.f32 %v122, 0.0
    %v128 = vpack.c.bf16 %v127, %v127
    %v129 = vld [vmem:[#allocation6] sm:$0xf]
    %v130 = vld [vmem:[#allocation6 + $0x4] sm:$0xf]
    %v131 = vld [vmem:[#allocation6 + $0x8] sm:$0xf]
    %v132 = vld [vmem:[#allocation6 + $0xc] sm:$0xf]
    %v133 = vld [vmem:[#allocation6 + $0x10] sm:$0xf]
    %v134 = vld [vmem:[#allocation6 + $0x14] sm:$0xf]
    %v135 = vld [vmem:[#allocation6 + $0x18] sm:$0xf]
    %v136 = vld [vmem:[#allocation6 + $0x1c] sm:$0xf]
    %v137 = vld [vmem:[#allocation6 + $0x20] sm:$0xf]
    %v138 = vld [vmem:[#allocation6 + $0x24] sm:$0xf]
    %v139 = vld [vmem:[#allocation6 + $0x28] sm:$0xf]
    %v140 = vld [vmem:[#allocation6 + $0x2c] sm:$0xf]
    %v141 = vld [vmem:[#allocation6 + $0x30] sm:$0xf]
    %v142 = vld [vmem:[#allocation6 + $0x34] sm:$0xf]
    %v143 = vld [vmem:[#allocation6 + $0x38] sm:$0xf]
    %v144 = vld [vmem:[#allocation6 + $0x3c] sm:$0xf]
    %v145 = vld [vmem:[%s4] sm:$0x1]
    %v147 = vlaneseq
    %v148 = vshrl.u32 %v147, 7
    %v149 = vsub.s32 0, %v148
    %v150 = vrot.slane %v145, %v149
    %v168 = vunpack.c.l.b16 %v129
    %v169 = vunpack.c.l.b16 %v130
    %v170 = vunpack.c.l.b16 %v131
    %v171 = vunpack.c.l.b16 %v132
    %v172 = vunpack.c.l.b16 %v133
    %v173 = vunpack.c.l.b16 %v134
    %v174 = vunpack.c.l.b16 %v135
    %v175 = vunpack.c.l.b16 %v136
    %v176 = vunpack.c.l.b16 %v137
    %v177 = vunpack.c.l.b16 %v138
    %v178 = vunpack.c.l.b16 %v139
    %v179 = vunpack.c.l.b16 %v140
    %v180 = vunpack.c.l.b16 %v141
    %v181 = vunpack.c.l.b16 %v142
    %v182 = vunpack.c.l.b16 %v143
    %v183 = vunpack.c.l.b16 %v144
    %v184 = vpack.c.b16 %v169, %v168
    %v185 = vpack.c.b16 %v171, %v170
    %v186 = vpack.c.b16 %v173, %v172
    %v187 = vpack.c.b16 %v175, %v174
    %v188 = vpack.c.b16 %v177, %v176
    %v189 = vpack.c.b16 %v179, %v178
    %v190 = vpack.c.b16 %v181, %v180
    %v191 = vpack.c.b16 %v183, %v182
    %200 = vmatprep.subr.bf16.mxu0 0
    %201 = vmatpush1.bf16.msra.mxu0 %v184
    %202 = vmatprep.subr.bf16.mxu0 0
    %203 = vmatpush1.bf16.msra.mxu0 %v185
    %204 = vmatprep.subr.bf16.mxu0 0
    %205 = vmatpush1.bf16.msra.mxu0 %v186
    %206 = vmatprep.subr.bf16.mxu0 0
    %207 = vmatpush1.bf16.msra.mxu0 %v187
    %208 = vmatprep.subr.bf16.mxu0 0
    %209 = vmatpush1.bf16.msra.mxu0 %v188
    %210 = vmatprep.subr.bf16.mxu0 0
    %211 = vmatpush1.bf16.msra.mxu0 %v189
    %212 = vmatprep.subr.bf16.mxu0 0
    %213 = vmatpush1.bf16.msra.mxu0 %v190
    %214 = vmatprep.subr.bf16.mxu0 0
    %215 = vmatpush1.bf16.msra.mxu0 %v191
    %216 = vmatprep.subr.bf16.mxu0 0
    %217 = vmatpush1.bf16.msra.mxu0 0
    %218 = vmatprep.subr.bf16.mxu0 0
    %219 = vmatpush1.bf16.msra.mxu0 0
    %220 = vmatprep.subr.bf16.mxu0 0
    %221 = vmatpush1.bf16.msra.mxu0 0
    %222 = vmatprep.subr.bf16.mxu0 0
    %223 = vmatpush1.bf16.msra.mxu0 0
    %224 = vmatprep.subr.bf16.mxu0 0
    %225 = vmatpush1.bf16.msra.mxu0 0
    %226 = vmatprep.subr.bf16.mxu0 0
    %227 = vmatpush1.bf16.msra.mxu0 0
    %228 = vmatprep.subr.bf16.mxu0 0
    %229 = vmatpush1.bf16.msra.mxu0 0
    %230 = vmatprep.subr.bf16.mxu0 0
    %231 = vmatpush1.bf16.msra.mxu0 0
    %232 = vmatprep.mubr.bf16.mxu0 0
    %233 = vmatmul.mubr.bf16.gmra.mrb[0].mxu0 %v128
    %v234 = vpop.f32.mrb[0].mxu0
    %v235 = vadd.f32 %v150, %v234
    %v236 = vpop.f32.mrb[0].mxu0
    %v237 = vpop.f32.mrb[0].mxu0
    %v238 = vpop.f32.mrb[0].mxu0
    %239 = vdwg.mxu0
    %240 = vst [vmem:[%s5] sm:$0xff] %v235
    // Predicated region
    $region34: #{linear_qnet_forward.1} parent=1 // pred_check
      _
    $region35: #{linear_qnet_forward.1} parent=1 // pred_check_branch
      %242 = sbr.rel (0) target = $region37
    $region36: #{linear_qnet_forward.1} parent=1 // pred_region
      _
    $region37: #{linear_qnet_forward.1} parent=1 // pred_fallthru
      _
    // Predicated region
    $region38: #{linear_qnet_forward.1} parent=1 // pred_check
      _
    $region39: #{linear_qnet_forward.1} parent=1 // pred_check_branch
      %244 = sbr.rel (0) target = $region41
    $region40: #{linear_qnet_forward.1} parent=1 // pred_region
      _
    $region41: #{linear_qnet_forward.1} parent=1 // pred_fallthru
      _
    %245 = vsyncpa [#allocation3], 1
    %246 = vsyncpa [#allocation5], 1

</llo_original>
